<compile_context>
chip_gen: v7x
topology: tpu7x:2x2x1
jax: 0.10.0
libtpu: 0.0.40
codegen_flags: <defaults>
</compile_context>

<pallas_src>
import functools

import jax
import jax.numpy as jnp
from jax import lax
from jax.experimental import pallas as pl
from jax.experimental.pallas import tpu as pltpu


def _elbo_kernel(x_ref, lbl_ref, muw_ref, rhow_ref, epsw_ref,
                 mub_ref, rhob_ref, epsb_ref, out_ref,
                 *, kl_weight, num_samples, inv_batch):
    x = x_ref[...]                      # (B, D)
    mu_w = muw_ref[...]                 # (D, C)
    rho_w = rhow_ref[...]               # (D, C)
    mu_b = mub_ref[...]                 # (1, C)
    rho_b = rhob_ref[...]               # (1, C)

    # ---- sample-invariant work (hoisted out of the MC loop) ----
    # numerically stable softplus: sigma = max(rho, 0) + log1p(exp(-|rho|))
    sig_w = jnp.maximum(rho_w, 0.0) + jnp.log1p(jnp.exp(-jnp.abs(rho_w)))
    sig_b = jnp.maximum(rho_b, 0.0) + jnp.log1p(jnp.exp(-jnp.abs(rho_b)))
    # stable log(sigma): softplus(rho) ~= exp(rho) for very negative rho, so
    # log(softplus(rho)) ~= rho there (avoids log(0) = -inf underflow).
    log_sig_w = jnp.where(rho_w < -20.0, rho_w, jnp.log(sig_w))
    log_sig_b = jnp.where(rho_b < -20.0, rho_b, jnp.log(sig_b))

    B = x.shape[0]
    C = mu_w.shape[1]
    lane = lax.broadcasted_iota(jnp.int32, (B, C), 1)
    onehot = (lane == lbl_ref[...]).astype(jnp.float32)     # (B, C)

    # KL decomposition (w = mu + sigma*eps):
    #   -log sig - 0.5*eps^2 + 0.5*w^2
    #     = (0.5*mu^2 - log sig) + mu*sig*eps + 0.5*(sig^2 - 1)*eps^2
    # The first term is sample-invariant; the second is accumulated per
    # sample elementwise and reduced to a scalar once after the loop.
    kl_const = (jnp.sum(0.5 * mu_w * mu_w - log_sig_w)
                + jnp.sum(0.5 * mu_b * mu_b - log_sig_b))
    musig_w = mu_w * sig_w
    musig_b = mu_b * sig_b
    half_s2m1_w = 0.5 * (sig_w * sig_w - 1.0)
    half_s2m1_b = 0.5 * (sig_b * sig_b - 1.0)

    eps_w_sum = jnp.zeros_like(mu_w)
    eps_w_sq = jnp.zeros_like(mu_w)
    eps_b_sum = jnp.zeros_like(mu_b)
    eps_b_sq = jnp.zeros_like(mu_b)
    ce_vec = jnp.zeros((B, 1), jnp.float32)

    # num_samples is a small compile-time constant -> fully unrolled; the
    # per-sample matmuls are independent, so the MXU pushes overlap.
    for s in range(num_samples):
        eps_w = epsw_ref[s]             # (D, C)
        eps_b = epsb_ref[s]             # (1, C)
        w = mu_w + sig_w * eps_w        # reparameterized weight sample
        b = mu_b + sig_b * eps_b

        logits = jnp.dot(x, w, preferred_element_type=jnp.float32) + b  # (B, C)

        # Cross-entropy with integer labels (no padded lanes -> no masking).
        m = jnp.max(logits, axis=-1, keepdims=True)
        lse = m + jnp.log(jnp.sum(jnp.exp(logits - m), axis=-1, keepdims=True))
        picked = jnp.sum(onehot * logits, axis=-1, keepdims=True)
        ce_vec += lse - picked

        eps_w_sum += eps_w
        eps_w_sq += eps_w * eps_w
        eps_b_sum += eps_b
        eps_b_sq += eps_b * eps_b

    ce_sum = jnp.sum(ce_vec)
    kl_resid = (jnp.sum(musig_w * eps_w_sum + half_s2m1_w * eps_w_sq)
                + jnp.sum(musig_b * eps_b_sum + half_s2m1_b * eps_b_sq))
    kl_total = num_samples * kl_const + kl_resid

    elbo = (ce_sum * inv_batch + kl_weight * kl_total) * (1.0 / num_samples)
    out_ref[0] = elbo                   # single scalar store to SMEM


def elbo_loss(x, labels, mu_w, rho_w, eps_w, mu_b, rho_b, eps_b,
              *, kl_weight, num_samples):
    """labels must already be (B, 1) int32 so the wrapper adds no XLA ops."""
    B, D = x.shape
    C = mu_w.shape[1]
    assert labels.shape == (B, 1) and labels.dtype == jnp.int32
    assert eps_w.shape == (num_samples, D, C)
    assert eps_b.shape == (num_samples, 1, C)

    kernel = functools.partial(
        _elbo_kernel,
        kl_weight=float(kl_weight),
        num_samples=int(num_samples),
        inv_batch=1.0 / float(B))

    # Single invocation, no grid: every input is a whole-array VMEM block
    # (a few KB total, trivially within even v7x's 64 MiB); the (1,) scalar
    # output lives in SMEM.
    return pl.pallas_call(
        kernel,
        out_shape=jax.ShapeDtypeStruct((1,), jnp.float32),
        out_specs=pl.BlockSpec(memory_space=pltpu.MemorySpace.SMEM),
    )(x, labels, mu_w, rho_w, eps_w, mu_b, rho_b, eps_b)


def elbo_loss_ref(x, labels, mu_w, rho_w, eps_w, mu_b, rho_b, eps_b,
                  *, kl_weight, num_samples):
    """Plain-JAX reference for verification."""
    B = x.shape[0]
    lbl = labels.reshape(-1)
    sig_w = jax.nn.softplus(rho_w)
    sig_b = jax.nn.softplus(rho_b)
    agg = jnp.zeros((1,), jnp.float32)
    for s in range(num_samples):
        w = mu_w + sig_w * eps_w[s]
        b = mu_b + sig_b * eps_b[s]
        logits = x @ w + b
        logp = jax.nn.log_softmax(logits, axis=-1)
        ce = -jnp.mean(logp[jnp.arange(B), lbl])
        kl = jnp.sum(-jnp.log(sig_w) - 0.5 * eps_w[s] ** 2 + 0.5 * w ** 2)
        kl += jnp.sum(-jnp.log(sig_b) - 0.5 * eps_b[s] ** 2 + 0.5 * b ** 2)
        agg = agg + ce + kl_weight * kl
    return agg / num_samples


if __name__ == "__main__":
    B, D, C = 8, 32, 16
    KL_WEIGHT = 1e-3
    NUM_SAMPLES = 3

    key = jax.random.PRNGKey(0)
    kx, kt, kmw, krw, kew, kmb, krb, keb = jax.random.split(key, 8)

    x = jax.random.normal(kx, (B, D), dtype=jnp.float32)
    # Created directly as (B, 1) int32 so no per-call cast/reshape op is needed.
    labels = jax.random.randint(kt, (B, 1), 0, C, dtype=jnp.int32)

    # Deterministic variational parameters (synthetic init, not a checkpoint).
    mu_w = 0.1 * jax.random.normal(kmw, (D, C), dtype=jnp.float32)
    rho_w = jnp.full((D, C), -3.0, jnp.float32) \
        + 0.01 * jax.random.normal(krw, (D, C), dtype=jnp.float32)
    mu_b = 0.1 * jax.random.normal(kmb, (1, C), dtype=jnp.float32)
    rho_b = jnp.full((1, C), -3.0, jnp.float32) \
        + 0.01 * jax.random.normal(krb, (1, C), dtype=jnp.float32)

    # Monte-Carlo noise for the reparameterized weight samples (one per sample).
    eps_w = jax.random.normal(kew, (NUM_SAMPLES, D, C), dtype=jnp.float32)
    eps_b = jax.random.normal(keb, (NUM_SAMPLES, 1, C), dtype=jnp.float32)

    out = elbo_loss(x, labels, mu_w, rho_w, eps_w, mu_b, rho_b, eps_b,
                    kl_weight=KL_WEIGHT, num_samples=NUM_SAMPLES)
    out = jax.block_until_ready(out)

    ref = elbo_loss_ref(x, labels, mu_w, rho_w, eps_w, mu_b, rho_b, eps_b,
                        kl_weight=KL_WEIGHT, num_samples=NUM_SAMPLES)
    assert jnp.allclose(out, ref, rtol=1e-4, atol=5e-4), (out, ref)

    print("KERNEL_OK")
</pallas_src>

<mosaic_0001>
module attributes {stable_mosaic.version = 11 : i64} {
  func.func @_elbo_kernel(%arg0: memref<8x32xf32, #tpu.memory_space<vmem>>, %arg1: memref<8x1xi32, #tpu.memory_space<vmem>>, %arg2: memref<32x16xf32, #tpu.memory_space<vmem>>, %arg3: memref<32x16xf32, #tpu.memory_space<vmem>>, %arg4: memref<3x32x16xf32, #tpu.memory_space<vmem>>, %arg5: memref<1x16xf32, #tpu.memory_space<vmem>>, %arg6: memref<1x16xf32, #tpu.memory_space<vmem>>, %arg7: memref<3x1x16xf32, #tpu.memory_space<vmem>>, %arg8: memref<1xf32, #tpu.memory_space<smem>>) attributes {dimension_semantics = [], scalar_prefetch = 0 : i64, scratch_operands = 0 : i64, tpu.core_type = #tpu.core_type<tc>} {
    %c0 = arith.constant 0 : index
    %c0_0 = arith.constant 0 : index
    %0 = vector.load %arg0[%c0, %c0_0] : memref<8x32xf32, #tpu.memory_space<vmem>>, vector<8x32xf32>
    %c0_1 = arith.constant 0 : index
    %c0_2 = arith.constant 0 : index
    %1 = vector.load %arg2[%c0_1, %c0_2] : memref<32x16xf32, #tpu.memory_space<vmem>>, vector<32x16xf32>
    %c0_3 = arith.constant 0 : index
    %c0_4 = arith.constant 0 : index
    %2 = vector.load %arg3[%c0_3, %c0_4] : memref<32x16xf32, #tpu.memory_space<vmem>>, vector<32x16xf32>
    %c0_5 = arith.constant 0 : index
    %c0_6 = arith.constant 0 : index
    %3 = vector.load %arg5[%c0_5, %c0_6] : memref<1x16xf32, #tpu.memory_space<vmem>>, vector<1x16xf32>
    %c0_7 = arith.constant 0 : index
    %c0_8 = arith.constant 0 : index
    %4 = vector.load %arg6[%c0_7, %c0_8] : memref<1x16xf32, #tpu.memory_space<vmem>>, vector<1x16xf32>
    %cst = arith.constant 0.000000e+00 : f32
    %5 = vector.broadcast %cst : f32 to vector<32x16xf32>
    %6 = arith.maximumf %2, %5 : vector<32x16xf32>
    %7 = math.absf %2 : vector<32x16xf32>
    %cst_9 = arith.constant 0.000000e+00 : f32
    %8 = vector.broadcast %cst_9 : f32 to vector<32x16xf32>
    %9 = arith.subf %8, %7 : vector<32x16xf32>
    %10 = math.exp %9 : vector<32x16xf32>
    %11 = math.log1p %10 : vector<32x16xf32>
    %12 = arith.addf %6, %11 : vector<32x16xf32>
    %cst_10 = arith.constant 0.000000e+00 : f32
    %13 = vector.broadcast %cst_10 : f32 to vector<1x16xf32>
    %14 = arith.maximumf %4, %13 : vector<1x16xf32>
    %15 = math.absf %4 : vector<1x16xf32>
    %cst_11 = arith.constant 0.000000e+00 : f32
    %16 = vector.broadcast %cst_11 : f32 to vector<1x16xf32>
    %17 = arith.subf %16, %15 : vector<1x16xf32>
    %18 = math.exp %17 : vector<1x16xf32>
    %19 = math.log1p %18 : vector<1x16xf32>
    %20 = arith.addf %14, %19 : vector<1x16xf32>
    %cst_12 = arith.constant -2.000000e+01 : f32
    %21 = vector.broadcast %cst_12 : f32 to vector<32x16xf32>
    %22 = arith.cmpf olt, %2, %21 : vector<32x16xf32>
    %23 = math.log %12 : vector<32x16xf32>
    %24 = arith.select %22, %2, %23 : vector<32x16xi1>, vector<32x16xf32>
    %cst_13 = arith.constant -2.000000e+01 : f32
    %25 = vector.broadcast %cst_13 : f32 to vector<1x16xf32>
    %26 = arith.cmpf olt, %4, %25 : vector<1x16xf32>
    %27 = math.log %20 : vector<1x16xf32>
    %28 = arith.select %26, %4, %27 : vector<1x16xi1>, vector<1x16xf32>
    %29 = tpu.iota {dimensions = array<i32: 1>} : vector<8x16xi32>
    %c0_14 = arith.constant 0 : index
    %c0_15 = arith.constant 0 : index
    %30 = vector.load %arg1[%c0_14, %c0_15] : memref<8x1xi32, #tpu.memory_space<vmem>>, vector<8x1xi32>
    %31 = vector.broadcast %30 : vector<8x1xi32> to vector<8x16xi32>
    %32 = arith.cmpi eq, %29, %31 : vector<8x16xi32>
    %33 = arith.extui %32 : vector<8x16xi1> to vector<8x16xi32>
    %34 = arith.sitofp %33 : vector<8x16xi32> to vector<8x16xf32>
    %cst_16 = arith.constant 5.000000e-01 : f32
    %35 = vector.broadcast %cst_16 : f32 to vector<32x16xf32>
    %36 = arith.mulf %35, %1 : vector<32x16xf32>
    %37 = arith.mulf %36, %1 : vector<32x16xf32>
    %38 = arith.subf %37, %24 : vector<32x16xf32>
    %39 = vector.shape_cast %38 : vector<32x16xf32> to vector<1x32x16xf32>
    %cst_17 = arith.constant dense<0.000000e+00> : vector<1xf32>
    %40 = vector.multi_reduction <add>, %39, %cst_17 [1, 2] : vector<1x32x16xf32> to vector<1xf32>
    %41 = vector.shape_cast %40 : vector<1xf32> to vector<1x1x1xf32>
    %42 = vector.extract %41[0, 0, 0] : f32 from vector<1x1x1xf32>
    %cst_18 = arith.constant 5.000000e-01 : f32
    %43 = vector.broadcast %cst_18 : f32 to vector<1x16xf32>
    %44 = arith.mulf %43, %3 : vector<1x16xf32>
    %45 = arith.mulf %44, %3 : vector<1x16xf32>
    %46 = arith.subf %45, %28 : vector<1x16xf32>
    %47 = vector.shape_cast %46 : vector<1x16xf32> to vector<1x1x16xf32>
    %cst_19 = arith.constant dense<0.000000e+00> : vector<1xf32>
    %48 = vector.multi_reduction <add>, %47, %cst_19 [1, 2] : vector<1x1x16xf32> to vector<1xf32>
    %49 = vector.shape_cast %48 : vector<1xf32> to vector<1x1x1xf32>
    %50 = vector.extract %49[0, 0, 0] : f32 from vector<1x1x1xf32>
    %51 = arith.addf %42, %50 : f32
    %52 = arith.mulf %1, %12 : vector<32x16xf32>
    %53 = arith.mulf %3, %20 : vector<1x16xf32>
    %54 = arith.mulf %12, %12 : vector<32x16xf32>
    %cst_20 = arith.constant 1.000000e+00 : f32
    %55 = vector.broadcast %cst_20 : f32 to vector<32x16xf32>
    %56 = arith.subf %54, %55 : vector<32x16xf32>
    %cst_21 = arith.constant 5.000000e-01 : f32
    %57 = vector.broadcast %cst_21 : f32 to vector<32x16xf32>
    %58 = arith.mulf %57, %56 : vector<32x16xf32>
    %59 = arith.mulf %20, %20 : vector<1x16xf32>
    %cst_22 = arith.constant 1.000000e+00 : f32
    %60 = vector.broadcast %cst_22 : f32 to vector<1x16xf32>
    %61 = arith.subf %59, %60 : vector<1x16xf32>
    %cst_23 = arith.constant 5.000000e-01 : f32
    %62 = vector.broadcast %cst_23 : f32 to vector<1x16xf32>
    %63 = arith.mulf %62, %61 : vector<1x16xf32>
    %cst_24 = arith.constant 0.000000e+00 : f32
    %64 = vector.broadcast %cst_24 : f32 to vector<32x16xf32>
    %cst_25 = arith.constant 0.000000e+00 : f32
    %65 = vector.broadcast %cst_25 : f32 to vector<32x16xf32>
    %cst_26 = arith.constant 0.000000e+00 : f32
    %66 = vector.broadcast %cst_26 : f32 to vector<1x16xf32>
    %cst_27 = arith.constant 0.000000e+00 : f32
    %67 = vector.broadcast %cst_27 : f32 to vector<1x16xf32>
    %cst_28 = arith.constant 0.000000e+00 : f32
    %68 = vector.broadcast %cst_28 : f32 to vector<8x1xf32>
    %c0_29 = arith.constant 0 : index
    %c0_30 = arith.constant 0 : index
    %c0_31 = arith.constant 0 : index
    %69 = vector.load %arg4[%c0_29, %c0_30, %c0_31] : memref<3x32x16xf32, #tpu.memory_space<vmem>>, vector<1x32x16xf32>
    %70 = vector.shape_cast %69 : vector<1x32x16xf32> to vector<32x16xf32>
    %c0_32 = arith.constant 0 : index
    %c0_33 = arith.constant 0 : index
    %c0_34 = arith.constant 0 : index
    %71 = vector.load %arg7[%c0_32, %c0_33, %c0_34] : memref<3x1x16xf32, #tpu.memory_space<vmem>>, vector<1x1x16xf32>
    %72 = vector.shape_cast %71 : vector<1x1x16xf32> to vector<1x16xf32>
    %73 = arith.mulf %12, %70 : vector<32x16xf32>
    %74 = arith.addf %1, %73 : vector<32x16xf32>
    %75 = arith.mulf %20, %72 : vector<1x16xf32>
    %76 = arith.addf %3, %75 : vector<1x16xf32>
    %cst_35 = arith.constant dense<0.000000e+00> : vector<8x16xf32>
    %77 = tpu.matmul %0, %74, %cst_35 {dimension_numbers = #tpu.dot_dimension_numbers<[1], [0], [0], [1], [0, 0, 1, 1], [], []>} : vector<8x32xf32>, vector<32x16xf32>, vector<8x16xf32> -> vector<8x16xf32>
    %78 = vector.broadcast %76 : vector<1x16xf32> to vector<8x16xf32>
    %79 = arith.addf %77, %78 : vector<8x16xf32>
    %cst_36 = arith.constant dense<0xFF800000> : vector<8xf32>
    %80 = vector.multi_reduction <maximumf>, %79, %cst_36 [1] : vector<8x16xf32> to vector<8xf32>
    %81 = vector.shape_cast %80 : vector<8xf32> to vector<8x1xf32>
    %82 = vector.broadcast %81 : vector<8x1xf32> to vector<8x16xf32>
    %83 = arith.subf %79, %82 : vector<8x16xf32>
    %84 = math.exp %83 : vector<8x16xf32>
    %cst_37 = arith.constant dense<0.000000e+00> : vector<8xf32>
    %85 = vector.multi_reduction <add>, %84, %cst_37 [1] : vector<8x16xf32> to vector<8xf32>
    %86 = vector.shape_cast %85 : vector<8xf32> to vector<8x1xf32>
    %87 = math.log %86 : vector<8x1xf32>
    %88 = arith.addf %81, %87 : vector<8x1xf32>
    %89 = arith.mulf %34, %79 : vector<8x16xf32>
    %cst_38 = arith.constant dense<0.000000e+00> : vector<8xf32>
    %90 = vector.multi_reduction <add>, %89, %cst_38 [1] : vector<8x16xf32> to vector<8xf32>
    %91 = vector.shape_cast %90 : vector<8xf32> to vector<8x1xf32>
    %92 = arith.subf %88, %91 : vector<8x1xf32>
    %93 = arith.addf %68, %92 : vector<8x1xf32>
    %94 = arith.addf %64, %70 : vector<32x16xf32>
    %95 = arith.mulf %70, %70 : vector<32x16xf32>
    %96 = arith.addf %65, %95 : vector<32x16xf32>
    %97 = arith.addf %66, %72 : vector<1x16xf32>
    %98 = arith.mulf %72, %72 : vector<1x16xf32>
    %99 = arith.addf %67, %98 : vector<1x16xf32>
    %c1 = arith.constant 1 : index
    %c0_39 = arith.constant 0 : index
    %c0_40 = arith.constant 0 : index
    %100 = vector.load %arg4[%c1, %c0_39, %c0_40] : memref<3x32x16xf32, #tpu.memory_space<vmem>>, vector<1x32x16xf32>
    %101 = vector.shape_cast %100 : vector<1x32x16xf32> to vector<32x16xf32>
    %c1_41 = arith.constant 1 : index
    %c0_42 = arith.constant 0 : index
    %c0_43 = arith.constant 0 : index
    %102 = vector.load %arg7[%c1_41, %c0_42, %c0_43] : memref<3x1x16xf32, #tpu.memory_space<vmem>>, vector<1x1x16xf32>
    %103 = vector.shape_cast %102 : vector<1x1x16xf32> to vector<1x16xf32>
    %104 = arith.mulf %12, %101 : vector<32x16xf32>
    %105 = arith.addf %1, %104 : vector<32x16xf32>
    %106 = arith.mulf %20, %103 : vector<1x16xf32>
    %107 = arith.addf %3, %106 : vector<1x16xf32>
    %cst_44 = arith.constant dense<0.000000e+00> : vector<8x16xf32>
    %108 = tpu.matmul %0, %105, %cst_44 {dimension_numbers = #tpu.dot_dimension_numbers<[1], [0], [0], [1], [0, 0, 1, 1], [], []>} : vector<8x32xf32>, vector<32x16xf32>, vector<8x16xf32> -> vector<8x16xf32>
    %109 = vector.broadcast %107 : vector<1x16xf32> to vector<8x16xf32>
    %110 = arith.addf %108, %109 : vector<8x16xf32>
    %cst_45 = arith.constant dense<0xFF800000> : vector<8xf32>
    %111 = vector.multi_reduction <maximumf>, %110, %cst_45 [1] : vector<8x16xf32> to vector<8xf32>
    %112 = vector.shape_cast %111 : vector<8xf32> to vector<8x1xf32>
    %113 = vector.broadcast %112 : vector<8x1xf32> to vector<8x16xf32>
    %114 = arith.subf %110, %113 : vector<8x16xf32>
    %115 = math.exp %114 : vector<8x16xf32>
    %cst_46 = arith.constant dense<0.000000e+00> : vector<8xf32>
    %116 = vector.multi_reduction <add>, %115, %cst_46 [1] : vector<8x16xf32> to vector<8xf32>
    %117 = vector.shape_cast %116 : vector<8xf32> to vector<8x1xf32>
    %118 = math.log %117 : vector<8x1xf32>
    %119 = arith.addf %112, %118 : vector<8x1xf32>
    %120 = arith.mulf %34, %110 : vector<8x16xf32>
    %cst_47 = arith.constant dense<0.000000e+00> : vector<8xf32>
    %121 = vector.multi_reduction <add>, %120, %cst_47 [1] : vector<8x16xf32> to vector<8xf32>
    %122 = vector.shape_cast %121 : vector<8xf32> to vector<8x1xf32>
    %123 = arith.subf %119, %122 : vector<8x1xf32>
    %124 = arith.addf %93, %123 : vector<8x1xf32>
    %125 = arith.addf %94, %101 : vector<32x16xf32>
    %126 = arith.mulf %101, %101 : vector<32x16xf32>
    %127 = arith.addf %96, %126 : vector<32x16xf32>
    %128 = arith.addf %97, %103 : vector<1x16xf32>
    %129 = arith.mulf %103, %103 : vector<1x16xf32>
    %130 = arith.addf %99, %129 : vector<1x16xf32>
    %c2 = arith.constant 2 : index
    %c0_48 = arith.constant 0 : index
    %c0_49 = arith.constant 0 : index
    %131 = vector.load %arg4[%c2, %c0_48, %c0_49] : memref<3x32x16xf32, #tpu.memory_space<vmem>>, vector<1x32x16xf32>
    %132 = vector.shape_cast %131 : vector<1x32x16xf32> to vector<32x16xf32>
    %c2_50 = arith.constant 2 : index
    %c0_51 = arith.constant 0 : index
    %c0_52 = arith.constant 0 : index
    %133 = vector.load %arg7[%c2_50, %c0_51, %c0_52] : memref<3x1x16xf32, #tpu.memory_space<vmem>>, vector<1x1x16xf32>
    %134 = vector.shape_cast %133 : vector<1x1x16xf32> to vector<1x16xf32>
    %135 = arith.mulf %12, %132 : vector<32x16xf32>
    %136 = arith.addf %1, %135 : vector<32x16xf32>
    %137 = arith.mulf %20, %134 : vector<1x16xf32>
    %138 = arith.addf %3, %137 : vector<1x16xf32>
    %cst_53 = arith.constant dense<0.000000e+00> : vector<8x16xf32>
    %139 = tpu.matmul %0, %136, %cst_53 {dimension_numbers = #tpu.dot_dimension_numbers<[1], [0], [0], [1], [0, 0, 1, 1], [], []>} : vector<8x32xf32>, vector<32x16xf32>, vector<8x16xf32> -> vector<8x16xf32>
    %140 = vector.broadcast %138 : vector<1x16xf32> to vector<8x16xf32>
    %141 = arith.addf %139, %140 : vector<8x16xf32>
    %cst_54 = arith.constant dense<0xFF800000> : vector<8xf32>
    %142 = vector.multi_reduction <maximumf>, %141, %cst_54 [1] : vector<8x16xf32> to vector<8xf32>
    %143 = vector.shape_cast %142 : vector<8xf32> to vector<8x1xf32>
    %144 = vector.broadcast %143 : vector<8x1xf32> to vector<8x16xf32>
    %145 = arith.subf %141, %144 : vector<8x16xf32>
    %146 = math.exp %145 : vector<8x16xf32>
    %cst_55 = arith.constant dense<0.000000e+00> : vector<8xf32>
    %147 = vector.multi_reduction <add>, %146, %cst_55 [1] : vector<8x16xf32> to vector<8xf32>
    %148 = vector.shape_cast %147 : vector<8xf32> to vector<8x1xf32>
    %149 = math.log %148 : vector<8x1xf32>
    %150 = arith.addf %143, %149 : vector<8x1xf32>
    %151 = arith.mulf %34, %141 : vector<8x16xf32>
    %cst_56 = arith.constant dense<0.000000e+00> : vector<8xf32>
    %152 = vector.multi_reduction <add>, %151, %cst_56 [1] : vector<8x16xf32> to vector<8xf32>
    %153 = vector.shape_cast %152 : vector<8xf32> to vector<8x1xf32>
    %154 = arith.subf %150, %153 : vector<8x1xf32>
    %155 = arith.addf %124, %154 : vector<8x1xf32>
    %156 = arith.addf %125, %132 : vector<32x16xf32>
    %157 = arith.mulf %132, %132 : vector<32x16xf32>
    %158 = arith.addf %127, %157 : vector<32x16xf32>
    %159 = arith.addf %128, %134 : vector<1x16xf32>
    %160 = arith.mulf %134, %134 : vector<1x16xf32>
    %161 = arith.addf %130, %160 : vector<1x16xf32>
    %162 = vector.shape_cast %155 : vector<8x1xf32> to vector<1x8x1xf32>
    %cst_57 = arith.constant dense<0.000000e+00> : vector<1xf32>
    %163 = vector.multi_reduction <add>, %162, %cst_57 [1, 2] : vector<1x8x1xf32> to vector<1xf32>
    %164 = vector.shape_cast %163 : vector<1xf32> to vector<1x1x1xf32>
    %165 = vector.extract %164[0, 0, 0] : f32 from vector<1x1x1xf32>
    %166 = arith.mulf %52, %156 : vector<32x16xf32>
    %167 = arith.mulf %58, %158 : vector<32x16xf32>
    %168 = arith.addf %166, %167 : vector<32x16xf32>
    %169 = vector.shape_cast %168 : vector<32x16xf32> to vector<1x32x16xf32>
    %cst_58 = arith.constant dense<0.000000e+00> : vector<1xf32>
    %170 = vector.multi_reduction <add>, %169, %cst_58 [1, 2] : vector<1x32x16xf32> to vector<1xf32>
    %171 = vector.shape_cast %170 : vector<1xf32> to vector<1x1x1xf32>
    %172 = vector.extract %171[0, 0, 0] : f32 from vector<1x1x1xf32>
    %173 = arith.mulf %53, %159 : vector<1x16xf32>
    %174 = arith.mulf %63, %161 : vector<1x16xf32>
    %175 = arith.addf %173, %174 : vector<1x16xf32>
    %176 = vector.shape_cast %175 : vector<1x16xf32> to vector<1x1x16xf32>
    %cst_59 = arith.constant dense<0.000000e+00> : vector<1xf32>
    %177 = vector.multi_reduction <add>, %176, %cst_59 [1, 2] : vector<1x1x16xf32> to vector<1xf32>
    %178 = vector.shape_cast %177 : vector<1xf32> to vector<1x1x1xf32>
    %179 = vector.extract %178[0, 0, 0] : f32 from vector<1x1x1xf32>
    %180 = arith.addf %172, %179 : f32
    %cst_60 = arith.constant 3.000000e+00 : f32
    %181 = arith.mulf %cst_60, %51 : f32
    %182 = arith.addf %181, %180 : f32
    %cst_61 = arith.constant 1.250000e-01 : f32
    %183 = arith.mulf %165, %cst_61 : f32
    %cst_62 = arith.constant 1.000000e-03 : f32
    %184 = arith.mulf %cst_62, %182 : f32
    %185 = arith.addf %183, %184 : f32
    %cst_63 = arith.constant 0.333333343 : f32
    %186 = arith.mulf %185, %cst_63 : f32
    %c0_64 = arith.constant 0 : index
    %187 = memref.load %arg8[%c0_64] : memref<1xf32, #tpu.memory_space<smem>>
    memref.store %186, %arg8[%c0_64] : memref<1xf32, #tpu.memory_space<smem>>
    return
  }
}

</mosaic_0001>

<llo_original>
// kernel: tpu_custom_call.1
$region0: #{tpu_custom_call.1}
  #allocation0 [shape = 'u32[]', space=smem, size = 0x4, offset = 0x4, fixed_abs, tag = 'smem constant byte address 0x4 - core index']
  #allocation1 [shape = 'u32[144,128]{1,0:T(1,128)}', space=vmem, size = 0x12000, scoped, tag = 'internal scratch']
  %s0 = inlined_call_operand.vmem [shape: f32[8,32], index: 0, kind: input, shape index: {}]
  %s1 = inlined_call_operand.vmem [shape: s32[8,1], index: 1, kind: input, shape index: {}]
  %s2 = inlined_call_operand.vmem [shape: f32[32,16], index: 2, kind: input, shape index: {}]
  %s3 = inlined_call_operand.vmem [shape: f32[32,16], index: 3, kind: input, shape index: {}]
  %s4 = inlined_call_operand.vmem [shape: f32[3,32,16], index: 4, kind: input, shape index: {}]
  %s5 = inlined_call_operand.vmem [shape: f32[1,16], index: 5, kind: input, shape index: {}]
  %s6 = inlined_call_operand.vmem [shape: f32[1,16], index: 6, kind: input, shape index: {}]
  %s7 = inlined_call_operand.vmem [shape: f32[3,1,16], index: 7, kind: input, shape index: {}]
  %s8 = inlined_call_operand.hbm [shape: f32[1], index: 8, kind: output, shape index: {}]
  %s9 = sld [smem:[#allocation0]]
  $region42: #{tpu_custom_call.1} parent=0
    _
  %s11 = ssub.s32 1, %s9
  %s12 = scalar_select 0, %s11, %s9
  $region1: #{tpu_custom_call.1} parent=0
    #allocation2 [shape = 'u8[512]{0}', space=smem, size = 0x200, scoped, tag = 'output window, operand 0, single buffered']
    #allocation3 [shape = 's32[1]{0}', space=sflag, size = 0x4, scoped, tag = 'scoped memory for tpu_custom_call.1']
    %13 = vsyncpa [#allocation3], 0
    // Predicated region
    $region2: #{tpu_custom_call.1} parent=1 // pred_check
      _
    $region3: #{tpu_custom_call.1} parent=1 // pred_check_branch
      %15 = sbr.rel (0) target = $region5
    $region4: #{tpu_custom_call.1} parent=1 // pred_region
      _
    $region5: #{tpu_custom_call.1} parent=1 // pred_fallthru
      _
    // Predicated region
    $region6: #{tpu_custom_call.1} parent=1 // pred_check
      _
    $region7: #{tpu_custom_call.1} parent=1 // pred_check_branch
      %17 = sbr.rel (0) target = $region9
    $region8: #{tpu_custom_call.1} parent=1 // pred_region
      _
    $region9: #{tpu_custom_call.1} parent=1 // pred_fallthru
      _
    // Predicated region
    $region10: #{tpu_custom_call.1} parent=1 // pred_check
      _
    $region11: #{tpu_custom_call.1} parent=1 // pred_check_branch
      %19 = sbr.rel (0) target = $region13
    $region12: #{tpu_custom_call.1} parent=1 // pred_region
      _
    $region13: #{tpu_custom_call.1} parent=1 // pred_fallthru
      _
    // Predicated region
    $region14: #{tpu_custom_call.1} parent=1 // pred_check
      _
    $region15: #{tpu_custom_call.1} parent=1 // pred_check_branch
      %21 = sbr.rel (0) target = $region17
    $region16: #{tpu_custom_call.1} parent=1 // pred_region
      _
    $region17: #{tpu_custom_call.1} parent=1 // pred_fallthru
      _
    // Predicated region
    $region18: #{tpu_custom_call.1} parent=1 // pred_check
      _
    $region19: #{tpu_custom_call.1} parent=1 // pred_check_branch
      %23 = sbr.rel (0) target = $region21
    $region20: #{tpu_custom_call.1} parent=1 // pred_region
      _
    $region21: #{tpu_custom_call.1} parent=1 // pred_fallthru
      _
    // Predicated region
    $region22: #{tpu_custom_call.1} parent=1 // pred_check
      _
    $region23: #{tpu_custom_call.1} parent=1 // pred_check_branch
      %25 = sbr.rel (0) target = $region25
    $region24: #{tpu_custom_call.1} parent=1 // pred_region
      _
    $region25: #{tpu_custom_call.1} parent=1 // pred_fallthru
      _
    // Predicated region
    $region26: #{tpu_custom_call.1} parent=1 // pred_check
      _
    $region27: #{tpu_custom_call.1} parent=1 // pred_check_branch
      %27 = sbr.rel (0) target = $region29
    $region28: #{tpu_custom_call.1} parent=1 // pred_region
      _
    $region29: #{tpu_custom_call.1} parent=1 // pred_fallthru
      _
    // Predicated region
    $region30: #{tpu_custom_call.1} parent=1 // pred_check
      _
    $region31: #{tpu_custom_call.1} parent=1 // pred_check_branch
      %29 = sbr.rel (0) target = $region33
    $region32: #{tpu_custom_call.1} parent=1 // pred_region
      _
    $region33: #{tpu_custom_call.1} parent=1 // pred_fallthru
      _
    %v30 = vld [vmem:[%s0] sm:$0xff]
    %v31 = vld [vmem:[%s2] sm:$0xff]
    %v32 = vld [vmem:[%s2 + $0x8] sm:$0xff]
    %v33 = vld [vmem:[%s2 + $0x10] sm:$0xff]
    %v34 = vld [vmem:[%s2 + $0x18] sm:$0xff]
    %v35 = vld [vmem:[%s3] sm:$0xff]
    %v36 = vld [vmem:[%s3 + $0x8] sm:$0xff]
    %v37 = vld [vmem:[%s3 + $0x10] sm:$0xff]
    %v38 = vld [vmem:[%s3 + $0x18] sm:$0xff]
    %v39 = vld [vmem:[%s5] sm:$0x1]
    %v40 = vld [vmem:[%s6] sm:$0x1]
    %v41 = vmax.f32 %v35, 0.0
    %v42 = vmax.f32 %v36, 0.0
    %v43 = vmax.f32 %v37, 0.0
    %v44 = vmax.f32 %v38, 0.0
    %v45 = vand.u32 2147483647, %v35
    %v46 = vand.u32 2147483647, %v36
    %v47 = vand.u32 2147483647, %v37
    %v48 = vand.u32 2147483647, %v38
    %v49 = vsub.f32 0.0, %v45
    %v50 = vsub.f32 0.0, %v46
    %v51 = vsub.f32 0.0, %v47
    %v52 = vsub.f32 0.0, %v48
    %v53 = vmul.f32 %v49, 1.442695
    %v54 = vpow.pop %v53
    %v55 = vmul.f32 %v50, 1.442695
    %v56 = vpow.pop %v55
    %v57 = vmul.f32 %v51, 1.442695
    %v58 = vpow.pop %v57
    %v59 = vmul.f32 %v52, 1.442695
    %v60 = vpow.pop %v59
    %v61 = vadd.f32 %v54, 1.0
    %v62 = vlog2.pop %v61
    %v63 = vmul.f32 %v62, 0.6931472
    %v64 = vmul.f32 -0.5, %v54
    %v65 = vadd.f32 %v64, 1.0
    %v66 = vmul.f32 %v65, %v54
    %v67 = vand.u32 2147483647, %v54
    %vm68 = vcmp.lt.f32.partialorder %v67, 0.0004427343
    %v69 = vsel %vm68, %v66, %v63
    %v70 = vadd.f32 %v56, 1.0
    %v71 = vlog2.pop %v70
    %v72 = vmul.f32 %v71, 0.6931472
    %v73 = vmul.f32 -0.5, %v56
    %v74 = vadd.f32 %v73, 1.0
    %v75 = vmul.f32 %v74, %v56
    %v76 = vand.u32 2147483647, %v56
    %vm77 = vcmp.lt.f32.partialorder %v76, 0.0004427343
    %v78 = vsel %vm77, %v75, %v72
    %v79 = vadd.f32 %v58, 1.0
    %v80 = vlog2.pop %v79
    %v81 = vmul.f32 %v80, 0.6931472
    %v82 = vmul.f32 -0.5, %v58
    %v83 = vadd.f32 %v82, 1.0
    %v84 = vmul.f32 %v83, %v58
    %v85 = vand.u32 2147483647, %v58
    %vm86 = vcmp.lt.f32.partialorder %v85, 0.0004427343
    %v87 = vsel %vm86, %v84, %v81
    %v88 = vadd.f32 %v60, 1.0
    %v89 = vlog2.pop %v88
    %v90 = vmul.f32 %v89, 0.6931472
    %v91 = vmul.f32 -0.5, %v60
    %v92 = vadd.f32 %v91, 1.0
    %v93 = vmul.f32 %v92, %v60
    %v94 = vand.u32 2147483647, %v60
    %vm95 = vcmp.lt.f32.partialorder %v94, 0.0004427343
    %v96 = vsel %vm95, %v93, %v90
    %v97 = vadd.f32 %v41, %v69
    %v98 = vadd.f32 %v42, %v78
    %v99 = vadd.f32 %v43, %v87
    %v100 = vadd.f32 %v44, %v96
    %v101 = vmax.f32 %v40, 0.0
    %v102 = vand.u32 2147483647, %v40
    %v103 = vsub.f32 0.0, %v102
    %v104 = vmul.f32 %v103, 1.442695
    %v105 = vpow.pop %v104
    %v106 = vadd.f32 %v105, 1.0
    %v107 = vlog2.pop %v106
    %v108 = vmul.f32 %v107, 0.6931472
    %v109 = vmul.f32 -0.5, %v105
    %v110 = vadd.f32 %v109, 1.0
    %v111 = vmul.f32 %v110, %v105
    %v112 = vand.u32 2147483647, %v105
    %vm113 = vcmp.lt.f32.partialorder %v112, 0.0004427343
    %v114 = vsel %vm113, %v111, %v108
    %v115 = vadd.f32 %v101, %v114
    %vm116 = vcmp.lt.f32.partialorder %v35, -20.0
    %vm117 = vcmp.lt.f32.partialorder %v36, -20.0
    %vm118 = vcmp.lt.f32.partialorder %v37, -20.0
    %vm119 = vcmp.lt.f32.partialorder %v38, -20.0
    %v120 = vlog2.pop %v97
    %v121 = vmul.f32 %v120, 0.6931472
    %v122 = vlog2.pop %v98
    %v123 = vmul.f32 %v122, 0.6931472
    %v124 = vlog2.pop %v99
    %v125 = vmul.f32 %v124, 0.6931472
    %v126 = vlog2.pop %v100
    %v127 = vmul.f32 %v126, 0.6931472
    %v128 = vsel %vm116, %v35, %v121
    %v129 = vsel %vm117, %v36, %v123
    %v130 = vsel %vm118, %v37, %v125
    %v131 = vsel %vm119, %v38, %v127
    %vm132 = vcmp.lt.f32.partialorder %v40, -20.0
    %v133 = vlog2.pop %v115
    %v134 = vmul.f32 %v133, 0.6931472
    %v135 = vsel %vm132, %v40, %v134
    %v136 = vlaneseq
    %v137 = vand.u32 %v136, 127
    %v138 = vld [vmem:[%s1] sm:$0xff]
    %139 = vset.pattern.permute.xlu0 0
    %140 = vperm.xlu0 %139, %v138
    %v141 = vpop.permute.xlu0 %140
    %vm142 = vcmp.eq.s32.totalorder %v137, %v141
    %v143 = vsel %vm142, 1, 0
    %v144 = vcvt.s32.f32 %v143
    %v145 = vmul.f32 %v31, 0.5
    %v146 = vmul.f32 %v32, 0.5
    %v147 = vmul.f32 %v33, 0.5
    %v148 = vmul.f32 %v34, 0.5
    %v149 = vmul.f32 %v145, %v31
    %v150 = vmul.f32 %v146, %v32
    %v151 = vmul.f32 %v147, %v33
    %v152 = vmul.f32 %v148, %v34
    %v153 = vsub.f32 %v149, %v128
    %v154 = vsub.f32 %v150, %v129
    %v155 = vsub.f32 %v151, %v130
    %v156 = vsub.f32 %v152, %v131
    %vm157 = vcmask 130048
    %v158 = vsel %vm157, %v153, 0.0
    %v159 = vsel %vm157, %v154, 0.0
    %v160 = vadd.f32 %v158, %v159
    %v161 = vsel %vm157, %v155, 0.0
    %v162 = vadd.f32 %v160, %v161
    %v163 = vsel %vm157, %v156, 0.0
    %v164 = vadd.f32 %v162, %v163
    %165 = vadd.xlane.f32.xlu0 %v164
    %v166 = vpop.xlane.xlu0 %165
    %v167 = vrot.slane %v166, 4
    %v168 = vadd.f32 %v166, %v167
    %v169 = vrot.slane %v168, 2
    %v170 = vadd.f32 %v168, %v169
    %v171 = vrot.slane %v170, 1
    %v172 = vadd.f32 %v170, %v171
    %s173 = vtos %v172
    %v174 = vmul.f32 %v39, 0.5
    %v175 = vmul.f32 %v174, %v39
    %v176 = vsub.f32 %v175, %v135
    %vm177 = vcmask 122880
    %v178 = vsel %vm177, %v176, 0.0
    %179 = vadd.xlane.f32.xlu0 %v178
    %v180 = vpop.xlane.xlu0 %179
    %v181 = vrot.slane %v180, 4
    %v182 = vadd.f32 %v180, %v181
    %v183 = vrot.slane %v182, 2
    %v184 = vadd.f32 %v182, %v183
    %v185 = vrot.slane %v184, 1
    %v186 = vadd.f32 %v184, %v185
    %s187 = vtos %v186
    %s188 = sadd.f32 %s173, %s187
    %v189 = vmul.f32 %v31, %v97
    %v190 = vmul.f32 %v32, %v98
    %v191 = vmul.f32 %v33, %v99
    %v192 = vmul.f32 %v34, %v100
    %v193 = vmul.f32 %v39, %v115
    %v194 = vmul.f32 %v97, %v97
    %v195 = vmul.f32 %v98, %v98
    %v196 = vmul.f32 %v99, %v99
    %v197 = vmul.f32 %v100, %v100
    %v198 = vsub.f32 %v194, 1.0
    %v199 = vsub.f32 %v195, 1.0
    %v200 = vsub.f32 %v196, 1.0
    %v201 = vsub.f32 %v197, 1.0
    %v202 = vmul.f32 %v198, 0.5
    %v203 = vmul.f32 %v199, 0.5
    %v204 = vmul.f32 %v200, 0.5
    %v205 = vmul.f32 %v201, 0.5
    %v206 = vmul.f32 %v115, %v115
    %v207 = vsub.f32 %v206, 1.0
    %v208 = vmul.f32 %v207, 0.5
    %v209 = vld [vmem:[%s4] sm:$0xff]
    %v210 = vld [vmem:[%s4 + $0x8] sm:$0xff]
    %v211 = vld [vmem:[%s4 + $0x10] sm:$0xff]
    %v212 = vld [vmem:[%s4 + $0x18] sm:$0xff]
    %v213 = vld [vmem:[%s7] sm:$0x1]
    %v214 = vmul.f32 %v97, %v209
    %v215 = vmul.f32 %v98, %v210
    %v216 = vmul.f32 %v99, %v211
    %v217 = vmul.f32 %v100, %v212
    %v218 = vadd.f32 %v31, %v214
    %v219 = vadd.f32 %v32, %v215
    %v220 = vadd.f32 %v33, %v216
    %v221 = vadd.f32 %v34, %v217
    %v222 = vmul.f32 %v115, %v213
    %v223 = vadd.f32 %v39, %v222
    %v225 = vlaneseq
    %v226 = vshrl.u32 %v225, 7
    %v227 = vsub.s32 0, %v226
    %v228 = vrot.slane %v223, %v227
    %vm230 = vcmask 261120
    %v232 = vsel %vm230, %v30, 0
    %234 = vmatprep.subr.mxu0 0.0
    %235 = vmatpush1.msra.mxu0 %v218
    %236 = vmatprep.subr.mxu0 0.0
    %237 = vmatpush1.msra.mxu0 %v219
    %238 = vmatprep.subr.mxu0 0.0
    %239 = vmatpush1.msra.mxu0 %v220
    %240 = vmatprep.subr.mxu0 0.0
    %241 = vmatpush1.msra.mxu0 %v221
    %242 = vmatprep.subr.mxu0 0.0
    %243 = vmatpush1.msra.mxu0 0.0
    %244 = vmatprep.subr.mxu0 0.0
    %245 = vmatpush1.msra.mxu0 0.0
    %246 = vmatprep.subr.mxu0 0.0
    %247 = vmatpush1.msra.mxu0 0.0
    %248 = vmatprep.subr.mxu0 0.0
    %249 = vmatpush1.msra.mxu0 0.0
    %250 = vmatprep.subr.mxu0 0.0
    %251 = vmatpush1.msra.mxu0 0.0
    %252 = vmatprep.subr.mxu0 0.0
    %253 = vmatpush1.msra.mxu0 0.0
    %254 = vmatprep.subr.mxu0 0.0
    %255 = vmatpush1.msra.mxu0 0.0
    %256 = vmatprep.subr.mxu0 0.0
    %257 = vmatpush1.msra.mxu0 0.0
    %258 = vmatprep.subr.mxu0 0.0
    %259 = vmatpush1.msra.mxu0 0.0
    %260 = vmatprep.subr.mxu0 0.0
    %261 = vmatpush1.msra.mxu0 0.0
    %262 = vmatprep.subr.mxu0 0.0
    %263 = vmatpush1.msra.mxu0 0.0
    %264 = vmatprep.subr.mxu0 0.0
    %265 = vmatpush1.msra.mxu0 0.0
    %266 = vmatprep.subr.mxu0 0.0
    %267 = vmatpush1.msra.mxu0 0.0
    %268 = vmatprep.subr.mxu0 0.0
    %269 = vmatpush1.msra.mxu0 0.0
    %270 = vmatprep.subr.mxu0 0.0
    %271 = vmatpush1.msra.mxu0 0.0
    %272 = vmatprep.subr.mxu0 0.0
    %273 = vmatpush1.msra.mxu0 0.0
    %274 = vmatprep.subr.mxu0 0.0
    %275 = vmatpush1.msra.mxu0 0.0
    %276 = vmatprep.subr.mxu0 0.0
    %277 = vmatpush1.msra.mxu0 0.0
    %278 = vmatprep.subr.mxu0 0.0
    %279 = vmatpush1.msra.mxu0 0.0
    %280 = vmatprep.subr.mxu0 0.0
    %281 = vmatpush1.msra.mxu0 0.0
    %282 = vmatprep.subr.mxu0 0.0
    %283 = vmatpush1.msra.mxu0 0.0
    %284 = vmatprep.subr.mxu0 0.0
    %285 = vmatpush1.msra.mxu0 0.0
    %286 = vmatprep.subr.mxu0 0.0
    %287 = vmatpush1.msra.mxu0 0.0
    %288 = vmatprep.subr.mxu0 0.0
    %289 = vmatpush1.msra.mxu0 0.0
    %290 = vmatprep.subr.mxu0 0.0
    %291 = vmatpush1.msra.mxu0 0.0
    %292 = vmatprep.subr.mxu0 0.0
    %293 = vmatpush1.msra.mxu0 0.0
    %294 = vmatprep.subr.mxu0 0.0
    %295 = vmatpush1.msra.mxu0 0.0
    %296 = vmatprep.subr.mxu0 0.0
    %297 = vmatpush1.msra.mxu0 0.0
    %298 = vmatprep.mubr.f32.mxu0 0.0
    %299 = vmatmul.mubr.f32.gmra.mrb[0].mxu0 %v232
    %v300 = vpop.f32.mrb[0].mxu0
    %v301 = vadd.f32 %v228, %v300
    %v302 = vpop.f32.mrb[0].mxu0
    %303 = vdwg.mxu0
    %v304 = vsel %vm157, %v301, -inf
    %305 = vmax.xlane.f32.xlu0 %v304
    %v306 = vpop.xlane.xlu0 %305
    %v307 = vsub.f32 %v301, %v306
    %v308 = vmul.f32 %v307, 1.442695
    %v309 = vpow.pop %v308
    %v310 = vsel %vm157, %v309, 0.0
    %311 = vadd.xlane.f32.xlu0 %v310
    %v312 = vpop.xlane.xlu0 %311
    %v313 = vlog2.pop %v312
    %v314 = vmul.f32 %v313, 0.6931472
    %v315 = vadd.f32 %v306, %v314
    %v316 = vmul.f32 %v144, %v301
    %v317 = vsel %vm157, %v316, 0.0
    %318 = vadd.xlane.f32.xlu0 %v317
    %v319 = vpop.xlane.xlu0 %318
    %v320 = vsub.f32 %v315, %v319
    %v321 = vadd.f32 %v320, 0.0
    %v322 = vadd.f32 %v209, 0.0
    %v323 = vadd.f32 %v210, 0.0
    %v324 = vadd.f32 %v211, 0.0
    %v325 = vadd.f32 %v212, 0.0
    %v326 = vmul.f32 %v209, %v209
    %v327 = vmul.f32 %v210, %v210
    %v328 = vmul.f32 %v211, %v211
    %v329 = vmul.f32 %v212, %v212
    %v330 = vadd.f32 %v326, 0.0
    %v331 = vadd.f32 %v327, 0.0
    %v332 = vadd.f32 %v328, 0.0
    %v333 = vadd.f32 %v329, 0.0
    %v334 = vadd.f32 %v213, 0.0
    %v335 = vmul.f32 %v213, %v213
    %v336 = vadd.f32 %v335, 0.0
    %s337 = scalar_lea.vmem %s4, 32
    %v338 = vld [vmem:[%s337] sm:$0xff]
    %v339 = vld [vmem:[%s337 + $0x8] sm:$0xff]
    %v340 = vld [vmem:[%s337 + $0x10] sm:$0xff]
    %v341 = vld [vmem:[%s337 + $0x18] sm:$0xff]
    %s342 = scalar_lea.vmem %s7, 1
    %v343 = vld [vmem:[%s342] sm:$0x1]
    %v344 = vmul.f32 %v97, %v338
    %v345 = vmul.f32 %v98, %v339
    %v346 = vmul.f32 %v99, %v340
    %v347 = vmul.f32 %v100, %v341
    %v348 = vadd.f32 %v31, %v344
    %v349 = vadd.f32 %v32, %v345
    %v350 = vadd.f32 %v33, %v346
    %v351 = vadd.f32 %v34, %v347
    %v352 = vmul.f32 %v115, %v343
    %v353 = vadd.f32 %v39, %v352
    %v355 = vlaneseq
    %v356 = vshrl.u32 %v355, 7
    %v357 = vsub.s32 0, %v356
    %v358 = vrot.slane %v353, %v357
    %360 = vmatprep.subr.mxu0 0.0
    %361 = vmatpush1.msra.mxu0 %v348
    %362 = vmatprep.subr.mxu0 0.0
    %363 = vmatpush1.msra.mxu0 %v349
    %364 = vmatprep.subr.mxu0 0.0
    %365 = vmatpush1.msra.mxu0 %v350
    %366 = vmatprep.subr.mxu0 0.0
    %367 = vmatpush1.msra.mxu0 %v351
    %368 = vmatprep.subr.mxu0 0.0
    %369 = vmatpush1.msra.mxu0 0.0
    %370 = vmatprep.subr.mxu0 0.0
    %371 = vmatpush1.msra.mxu0 0.0
    %372 = vmatprep.subr.mxu0 0.0
    %373 = vmatpush1.msra.mxu0 0.0
    %374 = vmatprep.subr.mxu0 0.0
    %375 = vmatpush1.msra.mxu0 0.0
    %376 = vmatprep.subr.mxu0 0.0
    %377 = vmatpush1.msra.mxu0 0.0
    %378 = vmatprep.subr.mxu0 0.0
    %379 = vmatpush1.msra.mxu0 0.0
    %380 = vmatprep.subr.mxu0 0.0
    %381 = vmatpush1.msra.mxu0 0.0
    %382 = vmatprep.subr.mxu0 0.0
    %383 = vmatpush1.msra.mxu0 0.0
    %384 = vmatprep.subr.mxu0 0.0
    %385 = vmatpush1.msra.mxu0 0.0
    %386 = vmatprep.subr.mxu0 0.0
    %387 = vmatpush1.msra.mxu0 0.0
    %388 = vmatprep.subr.mxu0 0.0
    %389 = vmatpush1.msra.mxu0 0.0
    %390 = vmatprep.subr.mxu0 0.0
    %391 = vmatpush1.msra.mxu0 0.0
    %392 = vmatprep.subr.mxu0 0.0
    %393 = vmatpush1.msra.mxu0 0.0
    %394 = vmatprep.subr.mxu0 0.0
    %395 = vmatpush1.msra.mxu0 0.0
    %396 = vmatprep.subr.mxu0 0.0
    %397 = vmatpush1.msra.mxu0 0.0
    %398 = vmatprep.subr.mxu0 0.0
    %399 = vmatpush1.msra.mxu0 0.0
    %400 = vmatprep.subr.mxu0 0.0
    %401 = vmatpush1.msra.mxu0 0.0
    %402 = vmatprep.subr.mxu0 0.0
    %403 = vmatpush1.msra.mxu0 0.0
    %404 = vmatprep.subr.mxu0 0.0
    %405 = vmatpush1.msra.mxu0 0.0
    %406 = vmatprep.subr.mxu0 0.0
    %407 = vmatpush1.msra.mxu0 0.0
    %408 = vmatprep.subr.mxu0 0.0
    %409 = vmatpush1.msra.mxu0 0.0
    %410 = vmatprep.subr.mxu0 0.0
    %411 = vmatpush1.msra.mxu0 0.0
    %412 = vmatprep.subr.mxu0 0.0
    %413 = vmatpush1.msra.mxu0 0.0
    %414 = vmatprep.subr.mxu0 0.0
    %415 = vmatpush1.msra.mxu0 0.0
    %416 = vmatprep.subr.mxu0 0.0
    %417 = vmatpush1.msra.mxu0 0.0
    %418 = vmatprep.subr.mxu0 0.0
    %419 = vmatpush1.msra.mxu0 0.0
    %420 = vmatprep.subr.mxu0 0.0
    %421 = vmatpush1.msra.mxu0 0.0
    %422 = vmatprep.subr.mxu0 0.0
    %423 = vmatpush1.msra.mxu0 0.0
    %424 = vmatprep.mubr.f32.mxu0 0.0
    %425 = vmatmul.mubr.f32.gmra.mrb[0].mxu0 %v232
    %v426 = vpop.f32.mrb[0].mxu0
    %v427 = vadd.f32 %v358, %v426
    %v428 = vpop.f32.mrb[0].mxu0
    %429 = vdwg.mxu0
    %v430 = vsel %vm157, %v427, -inf
    %431 = vmax.xlane.f32.xlu0 %v430
    %v432 = vpop.xlane.xlu0 %431
    %v433 = vsub.f32 %v427, %v432
    %v434 = vmul.f32 %v433, 1.442695
    %v435 = vpow.pop %v434
    %v436 = vsel %vm157, %v435, 0.0
    %437 = vadd.xlane.f32.xlu0 %v436
    %v438 = vpop.xlane.xlu0 %437
    %v439 = vlog2.pop %v438
    %v440 = vmul.f32 %v439, 0.6931472
    %v441 = vadd.f32 %v432, %v440
    %v442 = vmul.f32 %v144, %v427
    %v443 = vsel %vm157, %v442, 0.0
    %444 = vadd.xlane.f32.xlu0 %v443
    %v445 = vpop.xlane.xlu0 %444
    %v446 = vsub.f32 %v441, %v445
    %v447 = vadd.f32 %v321, %v446
    %v448 = vadd.f32 %v322, %v338
    %v449 = vadd.f32 %v323, %v339
    %v450 = vadd.f32 %v324, %v340
    %v451 = vadd.f32 %v325, %v341
    %v452 = vmul.f32 %v338, %v338
    %v453 = vmul.f32 %v339, %v339
    %v454 = vmul.f32 %v340, %v340
    %v455 = vmul.f32 %v341, %v341
    %v456 = vadd.f32 %v330, %v452
    %v457 = vadd.f32 %v331, %v453
    %v458 = vadd.f32 %v332, %v454
    %v459 = vadd.f32 %v333, %v455
    %v460 = vadd.f32 %v334, %v343
    %v461 = vmul.f32 %v343, %v343
    %v462 = vadd.f32 %v336, %v461
    %s463 = scalar_lea.vmem %s4, 64
    %v464 = vld [vmem:[%s463] sm:$0xff]
    %v465 = vld [vmem:[%s463 + $0x8] sm:$0xff]
    %v466 = vld [vmem:[%s463 + $0x10] sm:$0xff]
    %v467 = vld [vmem:[%s463 + $0x18] sm:$0xff]
    %s468 = scalar_lea.vmem %s7, 2
    %v469 = vld [vmem:[%s468] sm:$0x1]
    %v470 = vmul.f32 %v97, %v464
    %v471 = vmul.f32 %v98, %v465
    %v472 = vmul.f32 %v99, %v466
    %v473 = vmul.f32 %v100, %v467
    %v474 = vadd.f32 %v31, %v470
    %v475 = vadd.f32 %v32, %v471
    %v476 = vadd.f32 %v33, %v472
    %v477 = vadd.f32 %v34, %v473
    %v478 = vmul.f32 %v115, %v469
    %v479 = vadd.f32 %v39, %v478
    %v481 = vlaneseq
    %v482 = vshrl.u32 %v481, 7
    %v483 = vsub.s32 0, %v482
    %v484 = vrot.slane %v479, %v483
    %486 = vmatprep.subr.mxu0 0.0
    %487 = vmatpush1.msra.mxu0 %v474
    %488 = vmatprep.subr.mxu0 0.0
    %489 = vmatpush1.msra.mxu0 %v475
    %490 = vmatprep.subr.mxu0 0.0
    %491 = vmatpush1.msra.mxu0 %v476
    %492 = vmatprep.subr.mxu0 0.0
    %493 = vmatpush1.msra.mxu0 %v477
    %494 = vmatprep.subr.mxu0 0.0
    %495 = vmatpush1.msra.mxu0 0.0
    %496 = vmatprep.subr.mxu0 0.0
    %497 = vmatpush1.msra.mxu0 0.0
    %498 = vmatprep.subr.mxu0 0.0
    %499 = vmatpush1.msra.mxu0 0.0
    %500 = vmatprep.subr.mxu0 0.0
    %501 = vmatpush1.msra.mxu0 0.0
    %502 = vmatprep.subr.mxu0 0.0
    %503 = vmatpush1.msra.mxu0 0.0
    %504 = vmatprep.subr.mxu0 0.0
    %505 = vmatpush1.msra.mxu0 0.0
    %506 = vmatprep.subr.mxu0 0.0
    %507 = vmatpush1.msra.mxu0 0.0
    %508 = vmatprep.subr.mxu0 0.0
    %509 = vmatpush1.msra.mxu0 0.0
    %510 = vmatprep.subr.mxu0 0.0
    %511 = vmatpush1.msra.mxu0 0.0
    %512 = vmatprep.subr.mxu0 0.0
    %513 = vmatpush1.msra.mxu0 0.0
    %514 = vmatprep.subr.mxu0 0.0
    %515 = vmatpush1.msra.mxu0 0.0
    %516 = vmatprep.subr.mxu0 0.0
    %517 = vmatpush1.msra.mxu0 0.0
    %518 = vmatprep.subr.mxu0 0.0
    %519 = vmatpush1.msra.mxu0 0.0
    %520 = vmatprep.subr.mxu0 0.0
    %521 = vmatpush1.msra.mxu0 0.0
    %522 = vmatprep.subr.mxu0 0.0
    %523 = vmatpush1.msra.mxu0 0.0
    %524 = vmatprep.subr.mxu0 0.0
    %525 = vmatpush1.msra.mxu0 0.0
    %526 = vmatprep.subr.mxu0 0.0
    %527 = vmatpush1.msra.mxu0 0.0
    %528 = vmatprep.subr.mxu0 0.0
    %529 = vmatpush1.msra.mxu0 0.0
    %530 = vmatprep.subr.mxu0 0.0
    %531 = vmatpush1.msra.mxu0 0.0
    %532 = vmatprep.subr.mxu0 0.0
    %533 = vmatpush1.msra.mxu0 0.0
    %534 = vmatprep.subr.mxu0 0.0
    %535 = vmatpush1.msra.mxu0 0.0
    %536 = vmatprep.subr.mxu0 0.0
    %537 = vmatpush1.msra.mxu0 0.0
    %538 = vmatprep.subr.mxu0 0.0
    %539 = vmatpush1.msra.mxu0 0.0
    %540 = vmatprep.subr.mxu0 0.0
    %541 = vmatpush1.msra.mxu0 0.0
    %542 = vmatprep.subr.mxu0 0.0
    %543 = vmatpush1.msra.mxu0 0.0
    %544 = vmatprep.subr.mxu0 0.0
    %545 = vmatpush1.msra.mxu0 0.0
    %546 = vmatprep.subr.mxu0 0.0
    %547 = vmatpush1.msra.mxu0 0.0
    %548 = vmatprep.subr.mxu0 0.0
    %549 = vmatpush1.msra.mxu0 0.0
    %550 = vmatprep.mubr.f32.mxu0 0.0
    %551 = vmatmul.mubr.f32.gmra.mrb[0].mxu0 %v232
    %v552 = vpop.f32.mrb[0].mxu0
    %v553 = vadd.f32 %v484, %v552
    %v554 = vpop.f32.mrb[0].mxu0
    %555 = vdwg.mxu0
    %v556 = vsel %vm157, %v553, -inf
    %557 = vmax.xlane.f32.xlu0 %v556
    %v558 = vpop.xlane.xlu0 %557
    %v559 = vsub.f32 %v553, %v558
    %v560 = vmul.f32 %v559, 1.442695
    %v561 = vpow.pop %v560
    %v562 = vsel %vm157, %v561, 0.0
    %563 = vadd.xlane.f32.xlu0 %v562
    %v564 = vpop.xlane.xlu0 %563
    %v565 = vlog2.pop %v564
    %v566 = vmul.f32 %v565, 0.6931472
    %v567 = vadd.f32 %v558, %v566
    %v568 = vmul.f32 %v144, %v553
    %v569 = vsel %vm157, %v568, 0.0
    %570 = vadd.xlane.f32.xlu0 %v569
    %v571 = vpop.xlane.xlu0 %570
    %v572 = vsub.f32 %v567, %v571
    %v573 = vadd.f32 %v447, %v572
    %v574 = vadd.f32 %v448, %v464
    %v575 = vadd.f32 %v449, %v465
    %v576 = vadd.f32 %v450, %v466
    %v577 = vadd.f32 %v451, %v467
    %v578 = vmul.f32 %v464, %v464
    %v579 = vmul.f32 %v465, %v465
    %v580 = vmul.f32 %v466, %v466
    %v581 = vmul.f32 %v467, %v467
    %v582 = vadd.f32 %v456, %v578
    %v583 = vadd.f32 %v457, %v579
    %v584 = vadd.f32 %v458, %v580
    %v585 = vadd.f32 %v459, %v581
    %v586 = vadd.f32 %v460, %v469
    %v587 = vmul.f32 %v469, %v469
    %v588 = vadd.f32 %v462, %v587
    %vm589 = vcmask 7168
    %v590 = vsel %vm589, %v573, 0.0
    %591 = vadd.xlane.f32.xlu0 %v590
    %v592 = vpop.xlane.xlu0 %591
    %v593 = vrot.slane %v592, 4
    %v594 = vadd.f32 %v592, %v593
    %v595 = vrot.slane %v594, 2
    %v596 = vadd.f32 %v594, %v595
    %v597 = vrot.slane %v596, 1
    %v598 = vadd.f32 %v596, %v597
    %s599 = vtos %v598
    %v600 = vmul.f32 %v189, %v574
    %v601 = vmul.f32 %v190, %v575
    %v602 = vmul.f32 %v191, %v576
    %v603 = vmul.f32 %v192, %v577
    %v604 = vmul.f32 %v202, %v582
    %v605 = vmul.f32 %v203, %v583
    %v606 = vmul.f32 %v204, %v584
    %v607 = vmul.f32 %v205, %v585
    %v608 = vadd.f32 %v600, %v604
    %v609 = vadd.f32 %v601, %v605
    %v610 = vadd.f32 %v602, %v606
    %v611 = vadd.f32 %v603, %v607
    %v612 = vsel %vm157, %v608, 0.0
    %v613 = vsel %vm157, %v609, 0.0
    %v614 = vadd.f32 %v612, %v613
    %v615 = vsel %vm157, %v610, 0.0
    %v616 = vadd.f32 %v614, %v615
    %v617 = vsel %vm157, %v611, 0.0
    %v618 = vadd.f32 %v616, %v617
    %619 = vadd.xlane.f32.xlu0 %v618
    %v620 = vpop.xlane.xlu0 %619
    %v621 = vrot.slane %v620, 4
    %v622 = vadd.f32 %v620, %v621
    %v623 = vrot.slane %v622, 2
    %v624 = vadd.f32 %v622, %v623
    %v625 = vrot.slane %v624, 1
    %v626 = vadd.f32 %v624, %v625
    %s627 = vtos %v626
    %v628 = vmul.f32 %v193, %v586
    %v629 = vmul.f32 %v208, %v588
    %v630 = vadd.f32 %v628, %v629
    %v631 = vsel %vm177, %v630, 0.0
    %632 = vadd.xlane.f32.xlu0 %v631
    %v633 = vpop.xlane.xlu0 %632
    %v634 = vrot.slane %v633, 4
    %v635 = vadd.f32 %v633, %v634
    %v636 = vrot.slane %v635, 2
    %v637 = vadd.f32 %v635, %v636
    %v638 = vrot.slane %v637, 1
    %v639 = vadd.f32 %v637, %v638
    %s640 = vtos %v639
    %s641 = sadd.f32 %s627, %s640
    %s642 = smul.f32 %s188, 3.0
    %s643 = sadd.f32 %s642, %s641
    %s644 = smul.f32 %s599, 0.125
    %s645 = smul.f32 %s643, 0.001
    %s646 = sadd.f32 %s644, %s645
    %s647 = smul.f32 %s646, 0.33333334
    %s648 = scalar_lea.smem [#allocation2], 0
    %649 = sst [smem:[%s648]] %s647
    // Predicated region
    $region34: #{tpu_custom_call.1} parent=1 // pred_check
      _
    $region35: #{tpu_custom_call.1} parent=1 // pred_check_branch
      %651 = sbr.rel (0) target = $region37
    $region36: #{tpu_custom_call.1} parent=1 // pred_region
      %s653 = ssub.s32 16, 16
      %654 = vsyncadd [#allocation3], %s653
      %657 = dma.smem_to_hbm [#allocation2], 16, %s8, [#allocation3]
    $region37: #{tpu_custom_call.1} parent=1 // pred_fallthru
      _
    // Predicated region
    $region38: #{tpu_custom_call.1} parent=1 // pred_check
      _
    $region39: #{tpu_custom_call.1} parent=1 // pred_check_branch
      %659 = sbr.rel (0) target = $region41
    $region40: #{tpu_custom_call.1} parent=1 // pred_region
      %660 = dma.done [#allocation3], 16
    $region41: #{tpu_custom_call.1} parent=1 // pred_fallthru
      _
    %661 = sfence
    %662 = vsyncpa [#allocation3], 1

</llo_original>
